<compile_context>
chip_gen: v5e
topology: v5e:2x2
jax: 0.10.0
libtpu: 0.0.40
codegen_flags: <defaults>
</compile_context>

<pallas_src>
import numpy as np
import jax
import jax.numpy as jnp
from jax.experimental import pallas as pl
from jax.experimental.pallas import tpu as pltpu

NEG_SLOPE = 0.01   # nn.LeakyReLU default negative_slope
HIDDEN = 256       # classifier input/hidden width (nn.Linear(256, 256))
CLASSES = 2        # classes_num default
L_FUSE = 16        # temporal length of the fused multi-scale features
BVP_CH = 64        # channels per BVP branch in the stand-in


def _leaky(v):
    return jnp.where(v > 0, v, NEG_SLOPE * v)


# ---------------------------------------------------------------------------
# Fused Pallas kernel: BVP stand-in -> Task fusion -> avg-pool -> classifier
# ---------------------------------------------------------------------------
def meta_stress_kernel(
    x_row_ref,    # [B, T]          input signal (channels squeezed)
    x_col_ref,    # [B*T, 1]        same signal, column layout for lane-dense branches
    bvp_w_ref,    # [1, 2*BVP_CH]   both BVP branch weights, lane-concatenated
    peak_w_ref,   # [1, 1]
    pool_t_ref,   # [B*L, B*T]      block-diagonal temporal mean-pool matrix
    pool_l_ref,   # [B, B*L]        per-batch mean-over-L matrix
    task_w_ref,   # [4*BVP_CH, 256] Task 1x1-conv weight (in-channels x out-channels)
    task_b_ref,   # [1, 256]
    cls_w1_ref,   # [256, 256]
    cls_b1_ref,   # [1, 256]
    cls_w2_ref,   # [256, C]
    cls_b2_ref,   # [1, C]
    out_ref,      # [B, C]
    peak_ref,     # [B, T]
):
    """Everything stays VMEM-resident; features are lane-dense (channels last)."""
    # ---- peak head: tanh(x * peak_w) --------------------------------------
    # TODO(synk): BVPFeatrueExtraction's real peak head is not in the source;
    # this is a deterministic stand-in.
    peak_ref[...] = jnp.tanh(x_row_ref[...] * peak_w_ref[...])

    # ---- BVP stand-in: both branches in one lane-dense [B*T, 128] tensor ---
    # TODO(synk): BVPFeatrueExtraction's real body is not in the source;
    # stand-in = pointwise channel lift 1 -> 64 per branch + LeakyReLU.
    b = _leaky(x_col_ref[...] * bvp_w_ref[...])            # [B*T, 2*BVP_CH]

    # ---- temporal pooling T -> L_FUSE as a (block-diagonal) matmul (MXU) ---
    p = jnp.dot(pool_t_ref[...], b,
                preferred_element_type=jnp.float32)         # [B*L, 2*BVP_CH]
    # p[:, :64] is branch-1 features (p1), p[:, 64:] is branch-2 features (p2).

    # ---- Task fusion: 1x1 conv over 256 channels ---------------------------
    # TODO(synk): Task's real body is not in the source; stand-in = channel
    # concat [f16, f32, f64a, f64b] followed by a 256->256 pointwise conv.
    # Here f16 = f64b = p2 and f32 = f64a = p1, so by linearity
    #   feats @ W  ==  p1 @ (W1 + W2) + p2 @ (W0 + W3)
    # which we realise as one dense [.,128] @ [128,256] matmul.
    tw = task_w_ref[...]                                                 # [256, 256]
    w_p1 = tw[BVP_CH:2 * BVP_CH, :] + tw[2 * BVP_CH:3 * BVP_CH, :]       # [64, 256]
    w_p2 = tw[0:BVP_CH, :] + tw[3 * BVP_CH:4 * BVP_CH, :]                # [64, 256]
    w_eff = jnp.concatenate([w_p1, w_p2], axis=0)                        # [128, 256]
    fused = _leaky(
        jnp.dot(p, w_eff, preferred_element_type=jnp.float32)
        + task_b_ref[...])                                               # [B*L, 256]

    # ---- adaptive_avg_pool1d(., 1).squeeze(-1): mean over L as a matmul ----
    pooled = jnp.dot(pool_l_ref[...], fused,
                     preferred_element_type=jnp.float32)                 # [B, 256]

    # ---- classifier: Linear(256,256) -> LeakyReLU -> Linear(256, classes) --
    h = _leaky(jnp.dot(pooled, cls_w1_ref[...],
                       preferred_element_type=jnp.float32) + cls_b1_ref[...])
    out_ref[...] = (jnp.dot(h, cls_w2_ref[...],
                            preferred_element_type=jnp.float32) + cls_b2_ref[...])


# ---------------------------------------------------------------------------
# Trace-time (NumPy) pooling matrices -> compile-time constants under jit
# ---------------------------------------------------------------------------
def _make_pool_mats(B, T, L):
    f = T // L
    r = np.arange(B * L)
    c = np.arange(B * T)
    pool_t = (((r[:, None] // L) == (c[None, :] // T))
              & ((c[None, :] % T) // f == (r[:, None] % L))
              ).astype(np.float32) / f                        # [B*L, B*T]
    pool_l = ((np.arange(B)[:, None]
               == (np.arange(B * L)[None, :] // L))
              ).astype(np.float32) / L                        # [B, B*L]
    return jnp.asarray(pool_t), jnp.asarray(pool_l)


# ---------------------------------------------------------------------------
# Wrapper (single pallas_call, single grid step)
# ---------------------------------------------------------------------------
def _fused_forward(x, params):
    """x: [B, 1, T] -> (logits [B, CLASSES], peak [B, 1, T])."""
    B, c_in, T = x.shape
    assert c_in == 1 and T % L_FUSE == 0
    L = L_FUSE
    n_cls = params["cls_w2"].shape[1]

    # Free host-side relayouts of the tiny input (512 B at B=2, T=64).
    x_row = x.reshape(B, T)
    x_col = x.reshape(B * T, 1)

    pool_t, pool_l = _make_pool_mats(B, T, L)

    out, peak_row = pl.pallas_call(
        meta_stress_kernel,
        out_shape=(
            jax.ShapeDtypeStruct((B, n_cls), jnp.float32),
            jax.ShapeDtypeStruct((B, T), jnp.float32),
        ),
        grid=(1,),
        in_specs=[
            pl.BlockSpec((B, T), lambda i: (0, 0)),
            pl.BlockSpec((B * T, 1), lambda i: (0, 0)),
            pl.BlockSpec((1, 2 * BVP_CH), lambda i: (0, 0)),
            pl.BlockSpec((1, 1), lambda i: (0, 0)),
            pl.BlockSpec((B * L, B * T), lambda i: (0, 0)),
            pl.BlockSpec((B, B * L), lambda i: (0, 0)),
            pl.BlockSpec((4 * BVP_CH, HIDDEN), lambda i: (0, 0)),
            pl.BlockSpec((1, HIDDEN), lambda i: (0, 0)),
            pl.BlockSpec((HIDDEN, HIDDEN), lambda i: (0, 0)),
            pl.BlockSpec((1, HIDDEN), lambda i: (0, 0)),
            pl.BlockSpec((HIDDEN, n_cls), lambda i: (0, 0)),
            pl.BlockSpec((1, n_cls), lambda i: (0, 0)),
        ],
        out_specs=(
            pl.BlockSpec((B, n_cls), lambda i: (0, 0)),
            pl.BlockSpec((B, T), lambda i: (0, 0)),
        ),
        compiler_params=pltpu.CompilerParams(
            dimension_semantics=("arbitrary",)),
    )(
        x_row, x_col,
        params["bvp_w"], params["peak_w"],
        pool_t, pool_l,
        params["task_w"], params["task_b"],
        params["cls_w1"], params["cls_b1"],
        params["cls_w2"], params["cls_b2"],
    )
    return out, peak_row.reshape(B, 1, T)


meta_stress_forward = jax.jit(_fused_forward)


# ---------------------------------------------------------------------------
# Parameter construction (deterministic, synthetic; pre-shaped for the kernel)
# ---------------------------------------------------------------------------
def make_params(key):
    ks = jax.random.split(key, 6)
    scale = 0.05
    return {
        # BVP stand-in: pointwise channel-lift 1 -> 64 (two branches, lane-packed)
        # + peak head
        "bvp_w": scale * jax.random.normal(ks[0], (1, 2 * BVP_CH), jnp.float32),
        "peak_w": scale * jax.random.normal(ks[1], (1, 1), jnp.float32),
        # Task stand-in: 1x1 conv 256 -> 256 channel fusion (in x out layout)
        "task_w": scale * jax.random.normal(ks[2], (4 * BVP_CH, HIDDEN), jnp.float32),
        "task_b": scale * jax.random.normal(ks[3], (1, HIDDEN), jnp.float32),
        # classifier: Linear(256,256) -> LeakyReLU -> Linear(256, CLASSES)
        "cls_w1": scale * jax.random.normal(ks[4], (HIDDEN, HIDDEN), jnp.float32),
        "cls_b1": jnp.zeros((1, HIDDEN), jnp.float32),
        "cls_w2": scale * jax.random.normal(ks[5], (HIDDEN, CLASSES), jnp.float32),
        "cls_b2": jnp.zeros((1, CLASSES), jnp.float32),
    }


# ---------------------------------------------------------------------------
if __name__ == "__main__":
    key = jax.random.PRNGKey(0)
    k_in, k_par = jax.random.split(key)

    B, T = 2, 64
    x = jax.random.normal(k_in, (B, 1, T), jnp.float32)   # BVP-style 1-D signal, NCL
    params = make_params(k_par)

    out, peak = meta_stress_forward(x, params)
    jax.block_until_ready((out, peak))

    assert out.shape == (B, CLASSES)
    assert peak.shape == (B, 1, T)
    print("KERNEL_OK")
</pallas_src>

<mosaic_0001>
module attributes {stable_mosaic.version = 11 : i64} {
  func.func @meta_stress_kernel(%arg0: i32, %arg1: memref<2x64xf32, #tpu.memory_space<vmem>>, %arg2: memref<128x1xf32, #tpu.memory_space<vmem>>, %arg3: memref<1x128xf32, #tpu.memory_space<vmem>>, %arg4: memref<1x1xf32, #tpu.memory_space<vmem>>, %arg5: memref<32x128xf32, #tpu.memory_space<vmem>>, %arg6: memref<2x32xf32, #tpu.memory_space<vmem>>, %arg7: memref<256x256xf32, #tpu.memory_space<vmem>>, %arg8: memref<1x256xf32, #tpu.memory_space<vmem>>, %arg9: memref<256x256xf32, #tpu.memory_space<vmem>>, %arg10: memref<1x256xf32, #tpu.memory_space<vmem>>, %arg11: memref<256x2xf32, #tpu.memory_space<vmem>>, %arg12: memref<1x2xf32, #tpu.memory_space<vmem>>, %arg13: memref<2x2xf32, #tpu.memory_space<vmem>>, %arg14: memref<2x64xf32, #tpu.memory_space<vmem>>) attributes {dimension_semantics = [#tpu.dimension_semantics<arbitrary>], iteration_bounds = array<i64: 1>, scalar_prefetch = 0 : i64, scratch_operands = 0 : i64, tpu.core_type = #tpu.core_type<tc>, window_params = [{pipeline_mode = #tpu.pipeline_mode<synchronous>, transform_indices = @transform_0, window_bounds = array<i64: 2, 64>}, {pipeline_mode = #tpu.pipeline_mode<synchronous>, transform_indices = @transform_1, window_bounds = array<i64: 128, 1>}, {pipeline_mode = #tpu.pipeline_mode<synchronous>, transform_indices = @transform_2, window_bounds = array<i64: 1, 128>}, {pipeline_mode = #tpu.pipeline_mode<synchronous>, transform_indices = @transform_3, window_bounds = array<i64: 1, 1>}, {pipeline_mode = #tpu.pipeline_mode<synchronous>, transform_indices = @transform_4, window_bounds = array<i64: 32, 128>}, {pipeline_mode = #tpu.pipeline_mode<synchronous>, transform_indices = @transform_5, window_bounds = array<i64: 2, 32>}, {pipeline_mode = #tpu.pipeline_mode<synchronous>, transform_indices = @transform_6, window_bounds = array<i64: 256, 256>}, {pipeline_mode = #tpu.pipeline_mode<synchronous>, transform_indices = @transform_7, window_bounds = array<i64: 1, 256>}, {pipeline_mode = #tpu.pipeline_mode<synchronous>, transform_indices = @transform_8, window_bounds = array<i64: 256, 256>}, {pipeline_mode = #tpu.pipeline_mode<synchronous>, transform_indices = @transform_9, window_bounds = array<i64: 1, 256>}, {pipeline_mode = #tpu.pipeline_mode<synchronous>, transform_indices = @transform_10, window_bounds = array<i64: 256, 2>}, {pipeline_mode = #tpu.pipeline_mode<synchronous>, transform_indices = @transform_11, window_bounds = array<i64: 1, 2>}, {pipeline_mode = #tpu.pipeline_mode<synchronous>, transform_indices = @transform_12, window_bounds = array<i64: 2, 2>}, {pipeline_mode = #tpu.pipeline_mode<synchronous>, transform_indices = @transform_13, window_bounds = array<i64: 2, 64>}]} {
    %c0 = arith.constant 0 : index
    %c0_0 = arith.constant 0 : index
    %0 = vector.load %arg1[%c0, %c0_0] : memref<2x64xf32, #tpu.memory_space<vmem>>, vector<2x64xf32>
    %c0_1 = arith.constant 0 : index
    %c0_2 = arith.constant 0 : index
    %1 = vector.load %arg4[%c0_1, %c0_2] : memref<1x1xf32, #tpu.memory_space<vmem>>, vector<1x1xf32>
    %2 = vector.broadcast %1 : vector<1x1xf32> to vector<2x64xf32>
    %3 = arith.mulf %0, %2 : vector<2x64xf32>
    %4 = math.tanh %3 : vector<2x64xf32>
    %c0_3 = arith.constant 0 : index
    %c0_4 = arith.constant 0 : index
    %5 = vector.load %arg14[%c0_3, %c0_4] : memref<2x64xf32, #tpu.memory_space<vmem>>, vector<2x64xf32>
    tpu.vector_store %arg14[%c0_3, %c0_4], %4 {strides = array<i32>} : memref<2x64xf32, #tpu.memory_space<vmem>>, vector<2x64xf32>,
    %c0_5 = arith.constant 0 : index
    %c0_6 = arith.constant 0 : index
    %6 = vector.load %arg2[%c0_5, %c0_6] : memref<128x1xf32, #tpu.memory_space<vmem>>, vector<128x1xf32>
    %c0_7 = arith.constant 0 : index
    %c0_8 = arith.constant 0 : index
    %7 = vector.load %arg3[%c0_7, %c0_8] : memref<1x128xf32, #tpu.memory_space<vmem>>, vector<1x128xf32>
    %8 = vector.broadcast %6 : vector<128x1xf32> to vector<128x128xf32>
    %9 = vector.broadcast %7 : vector<1x128xf32> to vector<128x128xf32>
    %10 = arith.mulf %8, %9 : vector<128x128xf32>
    %cst = arith.constant 0.000000e+00 : f32
    %11 = vector.broadcast %cst : f32 to vector<128x128xf32>
    %12 = arith.cmpf ogt, %10, %11 : vector<128x128xf32>
    %cst_9 = arith.constant 0.00999999977 : f32
    %13 = vector.broadcast %cst_9 : f32 to vector<128x128xf32>
    %14 = arith.mulf %13, %10 : vector<128x128xf32>
    %15 = arith.select %12, %10, %14 : vector<128x128xi1>, vector<128x128xf32>
    %c0_10 = arith.constant 0 : index
    %c0_11 = arith.constant 0 : index
    %16 = vector.load %arg5[%c0_10, %c0_11] : memref<32x128xf32, #tpu.memory_space<vmem>>, vector<32x128xf32>
    %cst_12 = arith.constant dense<0.000000e+00> : vector<32x128xf32>
    %17 = tpu.matmul %16, %15, %cst_12 {dimension_numbers = #tpu.dot_dimension_numbers<[1], [0], [0], [1], [0, 0, 1, 1], [], []>} : vector<32x128xf32>, vector<128x128xf32>, vector<32x128xf32> -> vector<32x128xf32>
    %c0_13 = arith.constant 0 : index
    %c0_14 = arith.constant 0 : index
    %18 = vector.load %arg7[%c0_13, %c0_14] : memref<256x256xf32, #tpu.memory_space<vmem>>, vector<256x256xf32>
    %19 = vector.extract_strided_slice %18 {offsets = [64, 0], sizes = [64, 256], strides = [1, 1]} : vector<256x256xf32> to vector<64x256xf32>
    %20 = vector.extract_strided_slice %18 {offsets = [128, 0], sizes = [64, 256], strides = [1, 1]} : vector<256x256xf32> to vector<64x256xf32>
    %21 = arith.addf %19, %20 : vector<64x256xf32>
    %22 = vector.extract_strided_slice %18 {offsets = [0, 0], sizes = [64, 256], strides = [1, 1]} : vector<256x256xf32> to vector<64x256xf32>
    %23 = vector.extract_strided_slice %18 {offsets = [192, 0], sizes = [64, 256], strides = [1, 1]} : vector<256x256xf32> to vector<64x256xf32>
    %24 = arith.addf %22, %23 : vector<64x256xf32>
    %25 = tpu.concatenate %21, %24 in 0 : vector<64x256xf32>, vector<64x256xf32> -> vector<128x256xf32>
    %cst_15 = arith.constant dense<0.000000e+00> : vector<32x256xf32>
    %26 = tpu.matmul %17, %25, %cst_15 {dimension_numbers = #tpu.dot_dimension_numbers<[1], [0], [0], [1], [0, 0, 1, 1], [], []>} : vector<32x128xf32>, vector<128x256xf32>, vector<32x256xf32> -> vector<32x256xf32>
    %c0_16 = arith.constant 0 : index
    %c0_17 = arith.constant 0 : index
    %27 = vector.load %arg8[%c0_16, %c0_17] : memref<1x256xf32, #tpu.memory_space<vmem>>, vector<1x256xf32>
    %28 = vector.broadcast %27 : vector<1x256xf32> to vector<32x256xf32>
    %29 = arith.addf %26, %28 : vector<32x256xf32>
    %cst_18 = arith.constant 0.000000e+00 : f32
    %30 = vector.broadcast %cst_18 : f32 to vector<32x256xf32>
    %31 = arith.cmpf ogt, %29, %30 : vector<32x256xf32>
    %cst_19 = arith.constant 0.00999999977 : f32
    %32 = vector.broadcast %cst_19 : f32 to vector<32x256xf32>
    %33 = arith.mulf %32, %29 : vector<32x256xf32>
    %34 = arith.select %31, %29, %33 : vector<32x256xi1>, vector<32x256xf32>
    %c0_20 = arith.constant 0 : index
    %c0_21 = arith.constant 0 : index
    %35 = vector.load %arg6[%c0_20, %c0_21] : memref<2x32xf32, #tpu.memory_space<vmem>>, vector<2x32xf32>
    %cst_22 = arith.constant dense<0.000000e+00> : vector<2x256xf32>
    %36 = tpu.matmul %35, %34, %cst_22 {dimension_numbers = #tpu.dot_dimension_numbers<[1], [0], [0], [1], [0, 0, 1, 1], [], []>} : vector<2x32xf32>, vector<32x256xf32>, vector<2x256xf32> -> vector<2x256xf32>
    %c0_23 = arith.constant 0 : index
    %c0_24 = arith.constant 0 : index
    %37 = vector.load %arg9[%c0_23, %c0_24] : memref<256x256xf32, #tpu.memory_space<vmem>>, vector<256x256xf32>
    %cst_25 = arith.constant dense<0.000000e+00> : vector<2x256xf32>
    %38 = tpu.matmul %36, %37, %cst_25 {dimension_numbers = #tpu.dot_dimension_numbers<[1], [0], [0], [1], [0, 0, 1, 1], [], []>} : vector<2x256xf32>, vector<256x256xf32>, vector<2x256xf32> -> vector<2x256xf32>
    %c0_26 = arith.constant 0 : index
    %c0_27 = arith.constant 0 : index
    %39 = vector.load %arg10[%c0_26, %c0_27] : memref<1x256xf32, #tpu.memory_space<vmem>>, vector<1x256xf32>
    %40 = vector.broadcast %39 : vector<1x256xf32> to vector<2x256xf32>
    %41 = arith.addf %38, %40 : vector<2x256xf32>
    %cst_28 = arith.constant 0.000000e+00 : f32
    %42 = vector.broadcast %cst_28 : f32 to vector<2x256xf32>
    %43 = arith.cmpf ogt, %41, %42 : vector<2x256xf32>
    %cst_29 = arith.constant 0.00999999977 : f32
    %44 = vector.broadcast %cst_29 : f32 to vector<2x256xf32>
    %45 = arith.mulf %44, %41 : vector<2x256xf32>
    %46 = arith.select %43, %41, %45 : vector<2x256xi1>, vector<2x256xf32>
    %c0_30 = arith.constant 0 : index
    %c0_31 = arith.constant 0 : index
    %47 = vector.load %arg11[%c0_30, %c0_31] : memref<256x2xf32, #tpu.memory_space<vmem>>, vector<256x2xf32>
    %cst_32 = arith.constant dense<0.000000e+00> : vector<2x2xf32>
    %48 = tpu.matmul %46, %47, %cst_32 {dimension_numbers = #tpu.dot_dimension_numbers<[1], [0], [0], [1], [0, 0, 1, 1], [], []>} : vector<2x256xf32>, vector<256x2xf32>, vector<2x2xf32> -> vector<2x2xf32>
    %c0_33 = arith.constant 0 : index
    %c0_34 = arith.constant 0 : index
    %49 = vector.load %arg12[%c0_33, %c0_34] : memref<1x2xf32, #tpu.memory_space<vmem>>, vector<1x2xf32>
    %50 = vector.broadcast %49 : vector<1x2xf32> to vector<2x2xf32>
    %51 = arith.addf %48, %50 : vector<2x2xf32>
    %c0_35 = arith.constant 0 : index
    %c0_36 = arith.constant 0 : index
    %52 = vector.load %arg13[%c0_35, %c0_36] : memref<2x2xf32, #tpu.memory_space<vmem>>, vector<2x2xf32>
    tpu.vector_store %arg13[%c0_35, %c0_36], %51 {strides = array<i32>} : memref<2x2xf32, #tpu.memory_space<vmem>>, vector<2x2xf32>,
    return
  }
  func.func @transform_0(%arg0: i32) -> (i32, i32) {
    %c0_i32 = arith.constant 0 : i32
    %c0_i32_0 = arith.constant 0 : i32
    %c0_i32_1 = arith.constant 0 : i32
    return %c0_i32, %c0_i32_0 : i32, i32
  }
  func.func @transform_1(%arg0: i32) -> (i32, i32) {
    %c0_i32 = arith.constant 0 : i32
    %c0_i32_0 = arith.constant 0 : i32
    %c0_i32_1 = arith.constant 0 : i32
    return %c0_i32, %c0_i32_0 : i32, i32
  }
  func.func @transform_2(%arg0: i32) -> (i32, i32) {
    %c0_i32 = arith.constant 0 : i32
    %c0_i32_0 = arith.constant 0 : i32
    %c0_i32_1 = arith.constant 0 : i32
    return %c0_i32, %c0_i32_0 : i32, i32
  }
  func.func @transform_3(%arg0: i32) -> (i32, i32) {
    %c0_i32 = arith.constant 0 : i32
    %c0_i32_0 = arith.constant 0 : i32
    %c0_i32_1 = arith.constant 0 : i32
    return %c0_i32, %c0_i32_0 : i32, i32
  }
  func.func @transform_4(%arg0: i32) -> (i32, i32) {
    %c0_i32 = arith.constant 0 : i32
    %c0_i32_0 = arith.constant 0 : i32
    %c0_i32_1 = arith.constant 0 : i32
    return %c0_i32, %c0_i32_0 : i32, i32
  }
  func.func @transform_5(%arg0: i32) -> (i32, i32) {
    %c0_i32 = arith.constant 0 : i32
    %c0_i32_0 = arith.constant 0 : i32
    %c0_i32_1 = arith.constant 0 : i32
    return %c0_i32, %c0_i32_0 : i32, i32
  }
  func.func @transform_6(%arg0: i32) -> (i32, i32) {
    %c0_i32 = arith.constant 0 : i32
    %c0_i32_0 = arith.constant 0 : i32
    %c0_i32_1 = arith.constant 0 : i32
    return %c0_i32, %c0_i32_0 : i32, i32
  }
  func.func @transform_7(%arg0: i32) -> (i32, i32) {
    %c0_i32 = arith.constant 0 : i32
    %c0_i32_0 = arith.constant 0 : i32
    %c0_i32_1 = arith.constant 0 : i32
    return %c0_i32, %c0_i32_0 : i32, i32
  }
  func.func @transform_8(%arg0: i32) -> (i32, i32) {
    %c0_i32 = arith.constant 0 : i32
    %c0_i32_0 = arith.constant 0 : i32
    %c0_i32_1 = arith.constant 0 : i32
    return %c0_i32, %c0_i32_0 : i32, i32
  }
  func.func @transform_9(%arg0: i32) -> (i32, i32) {
    %c0_i32 = arith.constant 0 : i32
    %c0_i32_0 = arith.constant 0 : i32
    %c0_i32_1 = arith.constant 0 : i32
    return %c0_i32, %c0_i32_0 : i32, i32
  }
  func.func @transform_10(%arg0: i32) -> (i32, i32) {
    %c0_i32 = arith.constant 0 : i32
    %c0_i32_0 = arith.constant 0 : i32
    %c0_i32_1 = arith.constant 0 : i32
    return %c0_i32, %c0_i32_0 : i32, i32
  }
  func.func @transform_11(%arg0: i32) -> (i32, i32) {
    %c0_i32 = arith.constant 0 : i32
    %c0_i32_0 = arith.constant 0 : i32
    %c0_i32_1 = arith.constant 0 : i32
    return %c0_i32, %c0_i32_0 : i32, i32
  }
  func.func @transform_12(%arg0: i32) -> (i32, i32) {
    %c0_i32 = arith.constant 0 : i32
    %c0_i32_0 = arith.constant 0 : i32
    %c0_i32_1 = arith.constant 0 : i32
    return %c0_i32, %c0_i32_0 : i32, i32
  }
  func.func @transform_13(%arg0: i32) -> (i32, i32) {
    %c0_i32 = arith.constant 0 : i32
    %c0_i32_0 = arith.constant 0 : i32
    %c0_i32_1 = arith.constant 0 : i32
    return %c0_i32, %c0_i32_0 : i32, i32
  }
}

</mosaic_0001>

<llo_original>
// kernel: _fused_forward.1
$region0: #{_fused_forward.1}
  #allocation0 [shape = 'u32[]', space=smem, size = 0x4, offset = 0x4, fixed_abs, tag = 'smem constant byte address 0x4 - core index']
  #allocation1 [shape = 'u32[72,128]{1,0:T(1,128)}', space=vmem, size = 0x9000, scoped, tag = 'internal scratch']
  #allocation2 [shape = 'f32[1,1]{1,0:T(1,128)S(1)}', space=vmem, size = 0x200, scoped, tag = 'scoped memory for _fused_forward.1']
  %s0 = inlined_call_operand.vmem [shape: f32[2,64], index: 0, kind: input, shape index: {}]
  %s1 = inlined_call_operand.vmem [shape: f32[128,1], index: 1, kind: input, shape index: {}]
  %s2 = inlined_call_operand.vmem [shape: f32[1,128], index: 2, kind: input, shape index: {}]
  %s3 = inlined_call_operand.<no memory space> [shape: f32[1,1], index: 3, kind: input, shape index: {}]
  %s4 = inlined_call_operand.vmem [shape: f32[32,128], index: 4, kind: input, shape index: {}]
  %s5 = inlined_call_operand.vmem [shape: f32[2,32], index: 5, kind: input, shape index: {}]
  %s6 = inlined_call_operand.hbm [shape: f32[256,256], index: 6, kind: input, shape index: {}]
  %s7 = inlined_call_operand.vmem [shape: f32[1,256], index: 7, kind: input, shape index: {}]
  %s8 = inlined_call_operand.hbm [shape: f32[256,256], index: 8, kind: input, shape index: {}]
  %s9 = inlined_call_operand.vmem [shape: f32[1,256], index: 9, kind: input, shape index: {}]
  %s10 = inlined_call_operand.vmem [shape: f32[256,2], index: 10, kind: input, shape index: {}]
  %s11 = inlined_call_operand.vmem [shape: f32[1,2], index: 11, kind: input, shape index: {}]
  %s12 = inlined_call_operand.hbm [shape: f32[2,2], index: 12, kind: output, shape index: {0}]
  %s13 = inlined_call_operand.hbm [shape: f32[2,64], index: 13, kind: output, shape index: {1}]
  %14 = xla_tuple %s12, %s13
  %s15 = sld [smem:[#allocation0]]
  $region74: #{_fused_forward.1} parent=0
    _
  %s17 = ssub.s32 1, %s15
  %s18 = scalar_select 0, %s17, %s15
  %v19 = vstv %s3
  %20 = vst [vmem:[#allocation2] sm:$0x1] %v19
  $region1: #{_fused_forward.1} parent=0
    #allocation3 [shape = 'u8[262144]{0}', space=vmem, size = 0x40000, scoped, tag = 'input window, operand 6, single buffered']
    #allocation4 [shape = 's32[1]{0}', space=sflag, size = 0x4, scoped, tag = 'scoped memory for _fused_forward.1']
    #allocation5 [shape = 's32[1]{0}', space=sflag, size = 0x4, scoped, tag = 'scoped memory for _fused_forward.1']
    #allocation6 [shape = 'u8[262144]{0}', space=vmem, size = 0x40000, scoped, tag = 'input window, operand 8, single buffered']
    #allocation7 [shape = 's32[1]{0}', space=sflag, size = 0x4, scoped, tag = 'scoped memory for _fused_forward.1']
    #allocation8 [shape = 'u8[1024]{0}', space=vmem, size = 0x400, scoped, tag = 'output window, operand 0, single buffered']
    #allocation9 [shape = 'u8[1024]{0}', space=vmem, size = 0x400, scoped, tag = 'output window, operand 1, single buffered']
    #allocation10 [shape = 's32[1]{0}', space=sflag, size = 0x4, scoped, tag = 'scoped memory for _fused_forward.1']
    %21 = vsyncpa [#allocation4], 0
    %22 = vsyncpa [#allocation7], 0
    %23 = vsyncpa [#allocation5], 0
    %24 = vsyncpa [#allocation10], 0
    // Predicated region
    $region2: #{_fused_forward.1} parent=1 // pred_check
      _
    $region3: #{_fused_forward.1} parent=1 // pred_check_branch
      %26 = sbr.rel (0) target = $region5
    $region4: #{_fused_forward.1} parent=1 // pred_region
      _
    $region5: #{_fused_forward.1} parent=1 // pred_fallthru
      _
    // Predicated region
    $region6: #{_fused_forward.1} parent=1 // pred_check
      _
    $region7: #{_fused_forward.1} parent=1 // pred_check_branch
      %28 = sbr.rel (0) target = $region9
    $region8: #{_fused_forward.1} parent=1 // pred_region
      _
    $region9: #{_fused_forward.1} parent=1 // pred_fallthru
      _
    // Predicated region
    $region10: #{_fused_forward.1} parent=1 // pred_check
      _
    $region11: #{_fused_forward.1} parent=1 // pred_check_branch
      %30 = sbr.rel (0) target = $region13
    $region12: #{_fused_forward.1} parent=1 // pred_region
      _
    $region13: #{_fused_forward.1} parent=1 // pred_fallthru
      _
    // Predicated region
    $region14: #{_fused_forward.1} parent=1 // pred_check
      _
    $region15: #{_fused_forward.1} parent=1 // pred_check_branch
      %32 = sbr.rel (0) target = $region17
    $region16: #{_fused_forward.1} parent=1 // pred_region
      _
    $region17: #{_fused_forward.1} parent=1 // pred_fallthru
      _
    // Predicated region
    $region18: #{_fused_forward.1} parent=1 // pred_check
      _
    $region19: #{_fused_forward.1} parent=1 // pred_check_branch
      %34 = sbr.rel (0) target = $region21
    $region20: #{_fused_forward.1} parent=1 // pred_region
      _
    $region21: #{_fused_forward.1} parent=1 // pred_fallthru
      _
    // Predicated region
    $region22: #{_fused_forward.1} parent=1 // pred_check
      _
    $region23: #{_fused_forward.1} parent=1 // pred_check_branch
      %36 = sbr.rel (0) target = $region25
    $region24: #{_fused_forward.1} parent=1 // pred_region
      _
    $region25: #{_fused_forward.1} parent=1 // pred_fallthru
      _
    // Predicated region
    $region26: #{_fused_forward.1} parent=1 // pred_check
      _
    $region27: #{_fused_forward.1} parent=1 // pred_check_branch
      %38 = sbr.rel (0) target = $region29
    $region28: #{_fused_forward.1} parent=1 // pred_region
      %40 = vsyncadd [#allocation4], 0
      %s41 = sshll.u32 %s6, 4
      %s42 = int_to_ptr.hbm [resolvable:$true] %s41
      %s43 = sshll.u32 [#allocation3], 4
      %s44 = int_to_ptr.vmem [resolvable:$true] %s43
      %49 = dma.hbm_to_vmem [thread:$0]  %s42, 8192, %s44, [#allocation4], 256, 256, 16
    $region29: #{_fused_forward.1} parent=1 // pred_fallthru
      _
    // Predicated region
    $region30: #{_fused_forward.1} parent=1 // pred_check
      _
    $region31: #{_fused_forward.1} parent=1 // pred_check_branch
      %51 = sbr.rel (0) target = $region33
    $region32: #{_fused_forward.1} parent=1 // pred_region
      _
    $region33: #{_fused_forward.1} parent=1 // pred_fallthru
      _
    // Predicated region
    $region34: #{_fused_forward.1} parent=1 // pred_check
      _
    $region35: #{_fused_forward.1} parent=1 // pred_check_branch
      %53 = sbr.rel (0) target = $region37
    $region36: #{_fused_forward.1} parent=1 // pred_region
      %55 = vsyncadd [#allocation7], 0
      %s56 = sshll.u32 %s8, 4
      %s57 = int_to_ptr.hbm [resolvable:$true] %s56
      %s58 = sshll.u32 [#allocation6], 4
      %s59 = int_to_ptr.vmem [resolvable:$true] %s58
      %64 = dma.hbm_to_vmem [thread:$0]  %s57, 8192, %s59, [#allocation7], 256, 256, 16
    $region37: #{_fused_forward.1} parent=1 // pred_fallthru
      _
    // Predicated region
    $region38: #{_fused_forward.1} parent=1 // pred_check
      _
    $region39: #{_fused_forward.1} parent=1 // pred_check_branch
      %66 = sbr.rel (0) target = $region41
    $region40: #{_fused_forward.1} parent=1 // pred_region
      _
    $region41: #{_fused_forward.1} parent=1 // pred_fallthru
      _
    // Predicated region
    $region42: #{_fused_forward.1} parent=1 // pred_check
      _
    $region43: #{_fused_forward.1} parent=1 // pred_check_branch
      %68 = sbr.rel (0) target = $region45
    $region44: #{_fused_forward.1} parent=1 // pred_region
      _
    $region45: #{_fused_forward.1} parent=1 // pred_fallthru
      _
    // Predicated region
    $region46: #{_fused_forward.1} parent=1 // pred_check
      _
    $region47: #{_fused_forward.1} parent=1 // pred_check_branch
      %70 = sbr.rel (0) target = $region49
    $region48: #{_fused_forward.1} parent=1 // pred_region
      _
    $region49: #{_fused_forward.1} parent=1 // pred_fallthru
      _
    // Predicated region
    $region50: #{_fused_forward.1} parent=1 // pred_check
      _
    $region51: #{_fused_forward.1} parent=1 // pred_check_branch
      %72 = sbr.rel (0) target = $region53
    $region52: #{_fused_forward.1} parent=1 // pred_region
      %74 = dma.done [#allocation4], 8192
    $region53: #{_fused_forward.1} parent=1 // pred_fallthru
      _
    // Predicated region
    $region54: #{_fused_forward.1} parent=1 // pred_check
      _
    $region55: #{_fused_forward.1} parent=1 // pred_check_branch
      %76 = sbr.rel (0) target = $region57
    $region56: #{_fused_forward.1} parent=1 // pred_region
      %78 = dma.done [#allocation7], 8192
    $region57: #{_fused_forward.1} parent=1 // pred_fallthru
      _
    %v79 = vld [vmem:[%s0] sm:$0x3]
    %v80 = vld [vmem:[#allocation2] sm:$0x1]
    %v82 = vperm.slane %v80, 0
    %83 = vset.pattern.permute.xlu0 0
    %84 = vperm.xlu0 %83, %v82
    %v85 = vpop.permute.xlu0 %84
    %v87 = vmul.f32 %v79, %v85
    %v88 = vtanh.pop %v87
    %vm89 = vcmask 517120
    %90 = vst.msk [vmem:[#allocation9] sm:$0x3] %vm89, %v88
    %v91 = vld [vmem:[%s1] sm:$0xff]
    %v92 = vld [vmem:[%s1 + $0x8] sm:$0xff]
    %v93 = vld [vmem:[%s1 + $0x10] sm:$0xff]
    %v94 = vld [vmem:[%s1 + $0x18] sm:$0xff]
    %v95 = vld [vmem:[%s1 + $0x20] sm:$0xff]
    %v96 = vld [vmem:[%s1 + $0x28] sm:$0xff]
    %v97 = vld [vmem:[%s1 + $0x30] sm:$0xff]
    %v98 = vld [vmem:[%s1 + $0x38] sm:$0xff]
    %v99 = vld [vmem:[%s1 + $0x40] sm:$0xff]
    %v100 = vld [vmem:[%s1 + $0x48] sm:$0xff]
    %v101 = vld [vmem:[%s1 + $0x50] sm:$0xff]
    %v102 = vld [vmem:[%s1 + $0x58] sm:$0xff]
    %v103 = vld [vmem:[%s1 + $0x60] sm:$0xff]
    %v104 = vld [vmem:[%s1 + $0x68] sm:$0xff]
    %v105 = vld [vmem:[%s1 + $0x70] sm:$0xff]
    %v106 = vld [vmem:[%s1 + $0x78] sm:$0xff]
    %v107 = vld [vmem:[%s2] sm:$0x1]
    %109 = vset.pattern.permute.xlu0 0
    %110 = vperm.xlu0 %109, %v91
    %v111 = vpop.permute.xlu0 %110
    %114 = vset.pattern.permute.xlu0 0
    %115 = vperm.xlu0 %114, %v92
    %v116 = vpop.permute.xlu0 %115
    %119 = vset.pattern.permute.xlu0 0
    %120 = vperm.xlu0 %119, %v93
    %v121 = vpop.permute.xlu0 %120
    %124 = vset.pattern.permute.xlu0 0
    %125 = vperm.xlu0 %124, %v94
    %v126 = vpop.permute.xlu0 %125
    %129 = vset.pattern.permute.xlu0 0
    %130 = vperm.xlu0 %129, %v95
    %v131 = vpop.permute.xlu0 %130
    %134 = vset.pattern.permute.xlu0 0
    %135 = vperm.xlu0 %134, %v96
    %v136 = vpop.permute.xlu0 %135
    %139 = vset.pattern.permute.xlu0 0
    %140 = vperm.xlu0 %139, %v97
    %v141 = vpop.permute.xlu0 %140
    %144 = vset.pattern.permute.xlu0 0
    %145 = vperm.xlu0 %144, %v98
    %v146 = vpop.permute.xlu0 %145
    %149 = vset.pattern.permute.xlu0 0
    %150 = vperm.xlu0 %149, %v99
    %v151 = vpop.permute.xlu0 %150
    %154 = vset.pattern.permute.xlu0 0
    %155 = vperm.xlu0 %154, %v100
    %v156 = vpop.permute.xlu0 %155
    %159 = vset.pattern.permute.xlu0 0
    %160 = vperm.xlu0 %159, %v101
    %v161 = vpop.permute.xlu0 %160
    %164 = vset.pattern.permute.xlu0 0
    %165 = vperm.xlu0 %164, %v102
    %v166 = vpop.permute.xlu0 %165
    %169 = vset.pattern.permute.xlu0 0
    %170 = vperm.xlu0 %169, %v103
    %v171 = vpop.permute.xlu0 %170
    %174 = vset.pattern.permute.xlu0 0
    %175 = vperm.xlu0 %174, %v104
    %v176 = vpop.permute.xlu0 %175
    %179 = vset.pattern.permute.xlu0 0
    %180 = vperm.xlu0 %179, %v105
    %v181 = vpop.permute.xlu0 %180
    %184 = vset.pattern.permute.xlu0 0
    %185 = vperm.xlu0 %184, %v106
    %v186 = vpop.permute.xlu0 %185
    %v189 = vperm.slane %v107, 0
    %v191 = vmul.f32 %v111, %v189
    %v192 = vmul.f32 %v116, %v189
    %v193 = vmul.f32 %v121, %v189
    %v194 = vmul.f32 %v126, %v189
    %v195 = vmul.f32 %v131, %v189
    %v196 = vmul.f32 %v136, %v189
    %v197 = vmul.f32 %v141, %v189
    %v198 = vmul.f32 %v146, %v189
    %v199 = vmul.f32 %v151, %v189
    %v200 = vmul.f32 %v156, %v189
    %v201 = vmul.f32 %v161, %v189
    %v202 = vmul.f32 %v166, %v189
    %v203 = vmul.f32 %v171, %v189
    %v204 = vmul.f32 %v176, %v189
    %v205 = vmul.f32 %v181, %v189
    %v206 = vmul.f32 %v186, %v189
    %vm207 = vcmp.gt.f32.partialorder %v191, 0.0
    %vm208 = vcmp.gt.f32.partialorder %v192, 0.0
    %vm209 = vcmp.gt.f32.partialorder %v193, 0.0
    %vm210 = vcmp.gt.f32.partialorder %v194, 0.0
    %vm211 = vcmp.gt.f32.partialorder %v195, 0.0
    %vm212 = vcmp.gt.f32.partialorder %v196, 0.0
    %vm213 = vcmp.gt.f32.partialorder %v197, 0.0
    %vm214 = vcmp.gt.f32.partialorder %v198, 0.0
    %vm215 = vcmp.gt.f32.partialorder %v199, 0.0
    %vm216 = vcmp.gt.f32.partialorder %v200, 0.0
    %vm217 = vcmp.gt.f32.partialorder %v201, 0.0
    %vm218 = vcmp.gt.f32.partialorder %v202, 0.0
    %vm219 = vcmp.gt.f32.partialorder %v203, 0.0
    %vm220 = vcmp.gt.f32.partialorder %v204, 0.0
    %vm221 = vcmp.gt.f32.partialorder %v205, 0.0
    %vm222 = vcmp.gt.f32.partialorder %v206, 0.0
    %v223 = vmul.f32 %v191, 0.01
    %v224 = vmul.f32 %v192, 0.01
    %v225 = vmul.f32 %v193, 0.01
    %v226 = vmul.f32 %v194, 0.01
    %v227 = vmul.f32 %v195, 0.01
    %v228 = vmul.f32 %v196, 0.01
    %v229 = vmul.f32 %v197, 0.01
    %v230 = vmul.f32 %v198, 0.01
    %v231 = vmul.f32 %v199, 0.01
    %v232 = vmul.f32 %v200, 0.01
    %v233 = vmul.f32 %v201, 0.01
    %v234 = vmul.f32 %v202, 0.01
    %v235 = vmul.f32 %v203, 0.01
    %v236 = vmul.f32 %v204, 0.01
    %v237 = vmul.f32 %v205, 0.01
    %v238 = vmul.f32 %v206, 0.01
    %v239 = vsel %vm207, %v191, %v223
    %v240 = vsel %vm208, %v192, %v224
    %v241 = vsel %vm209, %v193, %v225
    %v242 = vsel %vm210, %v194, %v226
    %v243 = vsel %vm211, %v195, %v227
    %v244 = vsel %vm212, %v196, %v228
    %v245 = vsel %vm213, %v197, %v229
    %v246 = vsel %vm214, %v198, %v230
    %v247 = vsel %vm215, %v199, %v231
    %v248 = vsel %vm216, %v200, %v232
    %v249 = vsel %vm217, %v201, %v233
    %v250 = vsel %vm218, %v202, %v234
    %v251 = vsel %vm219, %v203, %v235
    %v252 = vsel %vm220, %v204, %v236
    %v253 = vsel %vm221, %v205, %v237
    %v254 = vsel %vm222, %v206, %v238
    %v255 = vld [vmem:[%s4] sm:$0xff]
    %v256 = vld [vmem:[%s4 + $0x8] sm:$0xff]
    %v257 = vld [vmem:[%s4 + $0x10] sm:$0xff]
    %v258 = vld [vmem:[%s4 + $0x18] sm:$0xff]
    %259 = vmatpush.msra.mxu0 %v254
    %260 = vmatpush.msra.mxu0 %v253
    %261 = vmatpush.msra.mxu0 %v252
    %262 = vmatpush.msra.mxu0 %v251
    %263 = vmatpush.msra.mxu0 %v250
    %264 = vmatpush.msra.mxu0 %v249
    %265 = vmatpush.msra.mxu0 %v248
    %266 = vmatpush.msra.mxu0 %v247
    %267 = vmatpush.msra.mxu0 %v246
    %268 = vmatpush.msra.mxu0 %v245
    %269 = vmatpush.msra.mxu0 %v244
    %270 = vmatpush.msra.mxu0 %v243
    %271 = vmatpush.msra.mxu0 %v242
    %272 = vmatpush.msra.mxu0 %v241
    %273 = vmatpush.msra.mxu0 %v240
    %274 = vmatpush.msra.mxu0 %v239
    %275 = vmatmul.f32.gmra.mxu0 %v255
    %v276 = vpop.f32.mrf.mxu0
    %v277 = vadd.f32 0.0, %v276
    %278 = vmatmul.f32.gmra.mxu0 %v256
    %v279 = vpop.f32.mrf.mxu0
    %v280 = vadd.f32 0.0, %v279
    %281 = vmatmul.f32.gmra.mxu0 %v257
    %v282 = vpop.f32.mrf.mxu0
    %v283 = vadd.f32 0.0, %v282
    %284 = vmatmul.f32.gmra.mxu0 %v258
    %v285 = vpop.f32.mrf.mxu0
    %v286 = vadd.f32 0.0, %v285
    %287 = vdwg.mxu0
    %v288 = vld [vmem:[#allocation3] sm:$0xff]
    %v289 = vld [vmem:[#allocation3 + $0x8] sm:$0xff]
    %v290 = vld [vmem:[#allocation3 + $0x10] sm:$0xff]
    %v291 = vld [vmem:[#allocation3 + $0x18] sm:$0xff]
    %v292 = vld [vmem:[#allocation3 + $0x20] sm:$0xff]
    %v293 = vld [vmem:[#allocation3 + $0x28] sm:$0xff]
    %v294 = vld [vmem:[#allocation3 + $0x30] sm:$0xff]
    %v295 = vld [vmem:[#allocation3 + $0x38] sm:$0xff]
    %v296 = vld [vmem:[#allocation3 + $0x40] sm:$0xff]
    %v297 = vld [vmem:[#allocation3 + $0x48] sm:$0xff]
    %v298 = vld [vmem:[#allocation3 + $0x50] sm:$0xff]
    %v299 = vld [vmem:[#allocation3 + $0x58] sm:$0xff]
    %v300 = vld [vmem:[#allocation3 + $0x60] sm:$0xff]
    %v301 = vld [vmem:[#allocation3 + $0x68] sm:$0xff]
    %v302 = vld [vmem:[#allocation3 + $0x70] sm:$0xff]
    %v303 = vld [vmem:[#allocation3 + $0x78] sm:$0xff]
    %v304 = vld [vmem:[#allocation3 + $0x80] sm:$0xff]
    %v305 = vld [vmem:[#allocation3 + $0x88] sm:$0xff]
    %v306 = vld [vmem:[#allocation3 + $0x90] sm:$0xff]
    %v307 = vld [vmem:[#allocation3 + $0x98] sm:$0xff]
    %v308 = vld [vmem:[#allocation3 + $0xa0] sm:$0xff]
    %v309 = vld [vmem:[#allocation3 + $0xa8] sm:$0xff]
    %v310 = vld [vmem:[#allocation3 + $0xb0] sm:$0xff]
    %v311 = vld [vmem:[#allocation3 + $0xb8] sm:$0xff]
    %v312 = vld [vmem:[#allocation3 + $0xc0] sm:$0xff]
    %v313 = vld [vmem:[#allocation3 + $0xc8] sm:$0xff]
    %v314 = vld [vmem:[#allocation3 + $0xd0] sm:$0xff]
    %v315 = vld [vmem:[#allocation3 + $0xd8] sm:$0xff]
    %v316 = vld [vmem:[#allocation3 + $0xe0] sm:$0xff]
    %v317 = vld [vmem:[#allocation3 + $0xe8] sm:$0xff]
    %v318 = vld [vmem:[#allocation3 + $0xf0] sm:$0xff]
    %v319 = vld [vmem:[#allocation3 + $0xf8] sm:$0xff]
    %v320 = vld [vmem:[#allocation3 + $0x100] sm:$0xff]
    %v321 = vld [vmem:[#allocation3 + $0x108] sm:$0xff]
    %v322 = vld [vmem:[#allocation3 + $0x110] sm:$0xff]
    %v323 = vld [vmem:[#allocation3 + $0x118] sm:$0xff]
    %v324 = vld [vmem:[#allocation3 + $0x120] sm:$0xff]
    %v325 = vld [vmem:[#allocation3 + $0x128] sm:$0xff]
    %v326 = vld [vmem:[#allocation3 + $0x130] sm:$0xff]
    %v327 = vld [vmem:[#allocation3 + $0x138] sm:$0xff]
    %v328 = vld [vmem:[#allocation3 + $0x140] sm:$0xff]
    %v329 = vld [vmem:[#allocation3 + $0x148] sm:$0xff]
    %v330 = vld [vmem:[#allocation3 + $0x150] sm:$0xff]
    %v331 = vld [vmem:[#allocation3 + $0x158] sm:$0xff]
    %v332 = vld [vmem:[#allocation3 + $0x160] sm:$0xff]
    %v333 = vld [vmem:[#allocation3 + $0x168] sm:$0xff]
    %v334 = vld [vmem:[#allocation3 + $0x170] sm:$0xff]
    %v335 = vld [vmem:[#allocation3 + $0x178] sm:$0xff]
    %v336 = vld [vmem:[#allocation3 + $0x180] sm:$0xff]
    %v337 = vld [vmem:[#allocation3 + $0x188] sm:$0xff]
    %v338 = vld [vmem:[#allocation3 + $0x190] sm:$0xff]
    %v339 = vld [vmem:[#allocation3 + $0x198] sm:$0xff]
    %v340 = vld [vmem:[#allocation3 + $0x1a0] sm:$0xff]
    %v341 = vld [vmem:[#allocation3 + $0x1a8] sm:$0xff]
    %v342 = vld [vmem:[#allocation3 + $0x1b0] sm:$0xff]
    %v343 = vld [vmem:[#allocation3 + $0x1b8] sm:$0xff]
    %v344 = vld [vmem:[#allocation3 + $0x1c0] sm:$0xff]
    %v345 = vld [vmem:[#allocation3 + $0x1c8] sm:$0xff]
    %v346 = vld [vmem:[#allocation3 + $0x1d0] sm:$0xff]
    %v347 = vld [vmem:[#allocation3 + $0x1d8] sm:$0xff]
    %v348 = vld [vmem:[#allocation3 + $0x1e0] sm:$0xff]
    %v349 = vld [vmem:[#allocation3 + $0x1e8] sm:$0xff]
    %v350 = vld [vmem:[#allocation3 + $0x1f0] sm:$0xff]
    %v351 = vld [vmem:[#allocation3 + $0x1f8] sm:$0xff]
    %v352 = vadd.f32 %v304, %v320
    %v353 = vadd.f32 %v305, %v321
    %v354 = vadd.f32 %v306, %v322
    %v355 = vadd.f32 %v307, %v323
    %v356 = vadd.f32 %v308, %v324
    %v357 = vadd.f32 %v309, %v325
    %v358 = vadd.f32 %v310, %v326
    %v359 = vadd.f32 %v311, %v327
    %v360 = vadd.f32 %v312, %v328
    %v361 = vadd.f32 %v313, %v329
    %v362 = vadd.f32 %v314, %v330
    %v363 = vadd.f32 %v315, %v331
    %v364 = vadd.f32 %v316, %v332
    %v365 = vadd.f32 %v317, %v333
    %v366 = vadd.f32 %v318, %v334
    %v367 = vadd.f32 %v319, %v335
    %v368 = vadd.f32 %v288, %v336
    %v369 = vadd.f32 %v289, %v337
    %v370 = vadd.f32 %v290, %v338
    %v371 = vadd.f32 %v291, %v339
    %v372 = vadd.f32 %v292, %v340
    %v373 = vadd.f32 %v293, %v341
    %v374 = vadd.f32 %v294, %v342
    %v375 = vadd.f32 %v295, %v343
    %v376 = vadd.f32 %v296, %v344
    %v377 = vadd.f32 %v297, %v345
    %v378 = vadd.f32 %v298, %v346
    %v379 = vadd.f32 %v299, %v347
    %v380 = vadd.f32 %v300, %v348
    %v381 = vadd.f32 %v301, %v349
    %v382 = vadd.f32 %v302, %v350
    %v383 = vadd.f32 %v303, %v351
    %v384 = vld [vmem:[%s7] sm:$0x3]
    %v386 = vperm.slane %v384, 0
    %v387 = vperm.slane %v384, 1
    %390 = vmatpush.msra.mxu0 %v382
    %391 = vmatpush.msra.mxu0 %v380
    %392 = vmatpush.msra.mxu0 %v378
    %393 = vmatpush.msra.mxu0 %v376
    %394 = vmatpush.msra.mxu0 %v374
    %395 = vmatpush.msra.mxu0 %v372
    %396 = vmatpush.msra.mxu0 %v370
    %397 = vmatpush.msra.mxu0 %v368
    %398 = vmatpush.msra.mxu0 %v366
    %399 = vmatpush.msra.mxu0 %v364
    %400 = vmatpush.msra.mxu0 %v362
    %401 = vmatpush.msra.mxu0 %v360
    %402 = vmatpush.msra.mxu0 %v358
    %403 = vmatpush.msra.mxu0 %v356
    %404 = vmatpush.msra.mxu0 %v354
    %405 = vmatpush.msra.mxu0 %v352
    %406 = vmatmul.f32.gmra.mxu0 %v277
    %v407 = vpop.f32.mrf.mxu0
    %v408 = vadd.f32 %v386, %v407
    %409 = vmatmul.f32.gmra.mxu0 %v280
    %v410 = vpop.f32.mrf.mxu0
    %v411 = vadd.f32 %v386, %v410
    %412 = vmatmul.f32.gmra.mxu0 %v283
    %v413 = vpop.f32.mrf.mxu0
    %v414 = vadd.f32 %v386, %v413
    %415 = vmatmul.f32.gmra.mxu0 %v286
    %v416 = vpop.f32.mrf.mxu0
    %v417 = vadd.f32 %v386, %v416
    %418 = vdwg.mxu0
    %419 = vmatpush.msra.mxu0 %v383
    %420 = vmatpush.msra.mxu0 %v381
    %421 = vmatpush.msra.mxu0 %v379
    %422 = vmatpush.msra.mxu0 %v377
    %423 = vmatpush.msra.mxu0 %v375
    %424 = vmatpush.msra.mxu0 %v373
    %425 = vmatpush.msra.mxu0 %v371
    %426 = vmatpush.msra.mxu0 %v369
    %427 = vmatpush.msra.mxu0 %v367
    %428 = vmatpush.msra.mxu0 %v365
    %429 = vmatpush.msra.mxu0 %v363
    %430 = vmatpush.msra.mxu0 %v361
    %431 = vmatpush.msra.mxu0 %v359
    %432 = vmatpush.msra.mxu0 %v357
    %433 = vmatpush.msra.mxu0 %v355
    %434 = vmatpush.msra.mxu0 %v353
    %435 = vmatmul.f32.gmra.mxu0 %v277
    %v436 = vpop.f32.mrf.mxu0
    %v437 = vadd.f32 %v387, %v436
    %438 = vmatmul.f32.gmra.mxu0 %v280
    %v439 = vpop.f32.mrf.mxu0
    %v440 = vadd.f32 %v387, %v439
    %441 = vmatmul.f32.gmra.mxu0 %v283
    %v442 = vpop.f32.mrf.mxu0
    %v443 = vadd.f32 %v387, %v442
    %444 = vmatmul.f32.gmra.mxu0 %v286
    %v445 = vpop.f32.mrf.mxu0
    %v446 = vadd.f32 %v387, %v445
    %447 = vdwg.mxu0
    %vm448 = vcmp.gt.f32.partialorder %v408, 0.0
    %vm449 = vcmp.gt.f32.partialorder %v437, 0.0
    %vm450 = vcmp.gt.f32.partialorder %v411, 0.0
    %vm451 = vcmp.gt.f32.partialorder %v440, 0.0
    %vm452 = vcmp.gt.f32.partialorder %v414, 0.0
    %vm453 = vcmp.gt.f32.partialorder %v443, 0.0
    %vm454 = vcmp.gt.f32.partialorder %v417, 0.0
    %vm455 = vcmp.gt.f32.partialorder %v446, 0.0
    %v456 = vmul.f32 %v408, 0.01
    %v457 = vmul.f32 %v437, 0.01
    %v458 = vmul.f32 %v411, 0.01
    %v459 = vmul.f32 %v440, 0.01
    %v460 = vmul.f32 %v414, 0.01
    %v461 = vmul.f32 %v443, 0.01
    %v462 = vmul.f32 %v417, 0.01
    %v463 = vmul.f32 %v446, 0.01
    %v464 = vsel %vm448, %v408, %v456
    %v465 = vsel %vm449, %v437, %v457
    %v466 = vsel %vm450, %v411, %v458
    %v467 = vsel %vm451, %v440, %v459
    %v468 = vsel %vm452, %v414, %v460
    %v469 = vsel %vm453, %v443, %v461
    %v470 = vsel %vm454, %v417, %v462
    %v471 = vsel %vm455, %v446, %v463
    %v472 = vld [vmem:[%s5] sm:$0x3]
    %vm473 = vcmask 261120
    %v475 = vsel %vm473, %v472, 0
    %477 = vmatpush.msra.mxu0 0.0
    %478 = vmatpush.msra.mxu0 0.0
    %479 = vmatpush.msra.mxu0 0.0
    %480 = vmatpush.msra.mxu0 0.0
    %481 = vmatpush.msra.mxu0 0.0
    %482 = vmatpush.msra.mxu0 0.0
    %483 = vmatpush.msra.mxu0 0.0
    %484 = vmatpush.msra.mxu0 0.0
    %485 = vmatpush.msra.mxu0 0.0
    %486 = vmatpush.msra.mxu0 0.0
    %487 = vmatpush.msra.mxu0 0.0
    %488 = vmatpush.msra.mxu0 0.0
    %489 = vmatpush.msra.mxu0 %v470
    %490 = vmatpush.msra.mxu0 %v468
    %491 = vmatpush.msra.mxu0 %v466
    %492 = vmatpush.msra.mxu0 %v464
    %493 = vmatmul.f32.gmra.mxu0 %v475
    %v494 = vpop.f32.mrf.mxu0
    %v495 = vadd.f32 0.0, %v494
    %496 = vdwg.mxu0
    %497 = vmatpush.msra.mxu0 0.0
    %498 = vmatpush.msra.mxu0 0.0
    %499 = vmatpush.msra.mxu0 0.0
    %500 = vmatpush.msra.mxu0 0.0
    %501 = vmatpush.msra.mxu0 0.0
    %502 = vmatpush.msra.mxu0 0.0
    %503 = vmatpush.msra.mxu0 0.0
    %504 = vmatpush.msra.mxu0 0.0
    %505 = vmatpush.msra.mxu0 0.0
    %506 = vmatpush.msra.mxu0 0.0
    %507 = vmatpush.msra.mxu0 0.0
    %508 = vmatpush.msra.mxu0 0.0
    %509 = vmatpush.msra.mxu0 %v471
    %510 = vmatpush.msra.mxu0 %v469
    %511 = vmatpush.msra.mxu0 %v467
    %512 = vmatpush.msra.mxu0 %v465
    %513 = vmatmul.f32.gmra.mxu0 %v475
    %v514 = vpop.f32.mrf.mxu0
    %v515 = vadd.f32 0.0, %v514
    %516 = vdwg.mxu0
    %v517 = vld [vmem:[#allocation6] sm:$0xff]
    %v518 = vld [vmem:[#allocation6 + $0x8] sm:$0xff]
    %v519 = vld [vmem:[#allocation6 + $0x10] sm:$0xff]
    %v520 = vld [vmem:[#allocation6 + $0x18] sm:$0xff]
    %v521 = vld [vmem:[#allocation6 + $0x20] sm:$0xff]
    %v522 = vld [vmem:[#allocation6 + $0x28] sm:$0xff]
    %v523 = vld [vmem:[#allocation6 + $0x30] sm:$0xff]
    %v524 = vld [vmem:[#allocation6 + $0x38] sm:$0xff]
    %v525 = vld [vmem:[#allocation6 + $0x40] sm:$0xff]
    %v526 = vld [vmem:[#allocation6 + $0x48] sm:$0xff]
    %v527 = vld [vmem:[#allocation6 + $0x50] sm:$0xff]
    %v528 = vld [vmem:[#allocation6 + $0x58] sm:$0xff]
    %v529 = vld [vmem:[#allocation6 + $0x60] sm:$0xff]
    %v530 = vld [vmem:[#allocation6 + $0x68] sm:$0xff]
    %v531 = vld [vmem:[#allocation6 + $0x70] sm:$0xff]
    %v532 = vld [vmem:[#allocation6 + $0x78] sm:$0xff]
    %v533 = vld [vmem:[#allocation6 + $0x80] sm:$0xff]
    %v534 = vld [vmem:[#allocation6 + $0x88] sm:$0xff]
    %v535 = vld [vmem:[#allocation6 + $0x90] sm:$0xff]
    %v536 = vld [vmem:[#allocation6 + $0x98] sm:$0xff]
    %v537 = vld [vmem:[#allocation6 + $0xa0] sm:$0xff]
    %v538 = vld [vmem:[#allocation6 + $0xa8] sm:$0xff]
    %v539 = vld [vmem:[#allocation6 + $0xb0] sm:$0xff]
    %v540 = vld [vmem:[#allocation6 + $0xb8] sm:$0xff]
    %v541 = vld [vmem:[#allocation6 + $0xc0] sm:$0xff]
    %v542 = vld [vmem:[#allocation6 + $0xc8] sm:$0xff]
    %v543 = vld [vmem:[#allocation6 + $0xd0] sm:$0xff]
    %v544 = vld [vmem:[#allocation6 + $0xd8] sm:$0xff]
    %v545 = vld [vmem:[#allocation6 + $0xe0] sm:$0xff]
    %v546 = vld [vmem:[#allocation6 + $0xe8] sm:$0xff]
    %v547 = vld [vmem:[#allocation6 + $0xf0] sm:$0xff]
    %v548 = vld [vmem:[#allocation6 + $0xf8] sm:$0xff]
    %v549 = vld [vmem:[#allocation6 + $0x100] sm:$0xff]
    %v550 = vld [vmem:[#allocation6 + $0x108] sm:$0xff]
    %v551 = vld [vmem:[#allocation6 + $0x110] sm:$0xff]
    %v552 = vld [vmem:[#allocation6 + $0x118] sm:$0xff]
    %v553 = vld [vmem:[#allocation6 + $0x120] sm:$0xff]
    %v554 = vld [vmem:[#allocation6 + $0x128] sm:$0xff]
    %v555 = vld [vmem:[#allocation6 + $0x130] sm:$0xff]
    %v556 = vld [vmem:[#allocation6 + $0x138] sm:$0xff]
    %v557 = vld [vmem:[#allocation6 + $0x140] sm:$0xff]
    %v558 = vld [vmem:[#allocation6 + $0x148] sm:$0xff]
    %v559 = vld [vmem:[#allocation6 + $0x150] sm:$0xff]
    %v560 = vld [vmem:[#allocation6 + $0x158] sm:$0xff]
    %v561 = vld [vmem:[#allocation6 + $0x160] sm:$0xff]
    %v562 = vld [vmem:[#allocation6 + $0x168] sm:$0xff]
    %v563 = vld [vmem:[#allocation6 + $0x170] sm:$0xff]
    %v564 = vld [vmem:[#allocation6 + $0x178] sm:$0xff]
    %v565 = vld [vmem:[#allocation6 + $0x180] sm:$0xff]
    %v566 = vld [vmem:[#allocation6 + $0x188] sm:$0xff]
    %v567 = vld [vmem:[#allocation6 + $0x190] sm:$0xff]
    %v568 = vld [vmem:[#allocation6 + $0x198] sm:$0xff]
    %v569 = vld [vmem:[#allocation6 + $0x1a0] sm:$0xff]
    %v570 = vld [vmem:[#allocation6 + $0x1a8] sm:$0xff]
    %v571 = vld [vmem:[#allocation6 + $0x1b0] sm:$0xff]
    %v572 = vld [vmem:[#allocation6 + $0x1b8] sm:$0xff]
    %v573 = vld [vmem:[#allocation6 + $0x1c0] sm:$0xff]
    %v574 = vld [vmem:[#allocation6 + $0x1c8] sm:$0xff]
    %v575 = vld [vmem:[#allocation6 + $0x1d0] sm:$0xff]
    %v576 = vld [vmem:[#allocation6 + $0x1d8] sm:$0xff]
    %v577 = vld [vmem:[#allocation6 + $0x1e0] sm:$0xff]
    %v578 = vld [vmem:[#allocation6 + $0x1e8] sm:$0xff]
    %v579 = vld [vmem:[#allocation6 + $0x1f0] sm:$0xff]
    %v580 = vld [vmem:[#allocation6 + $0x1f8] sm:$0xff]
    %v581 = vld [vmem:[%s9] sm:$0x3]
    %v583 = vperm.slane %v581, 0
    %v584 = vperm.slane %v581, 1
    %587 = vmatpush.msra.mxu0 %v547
    %588 = vmatpush.msra.mxu0 %v545
    %589 = vmatpush.msra.mxu0 %v543
    %590 = vmatpush.msra.mxu0 %v541
    %591 = vmatpush.msra.mxu0 %v539
    %592 = vmatpush.msra.mxu0 %v537
    %593 = vmatpush.msra.mxu0 %v535
    %594 = vmatpush.msra.mxu0 %v533
    %595 = vmatpush.msra.mxu0 %v531
    %596 = vmatpush.msra.mxu0 %v529
    %597 = vmatpush.msra.mxu0 %v527
    %598 = vmatpush.msra.mxu0 %v525
    %599 = vmatpush.msra.mxu0 %v523
    %600 = vmatpush.msra.mxu0 %v521
    %601 = vmatpush.msra.mxu0 %v519
    %602 = vmatpush.msra.mxu0 %v517
    %603 = vmatmul.f32.gmra.mxu0 %v495
    %v604 = vpop.f32.mrf.mxu0
    %v605 = vadd.f32 %v583, %v604
    %606 = vdwg.mxu0
    %607 = vmatpush.msra.mxu0 %v579
    %608 = vmatpush.msra.mxu0 %v577
    %609 = vmatpush.msra.mxu0 %v575
    %610 = vmatpush.msra.mxu0 %v573
    %611 = vmatpush.msra.mxu0 %v571
    %612 = vmatpush.msra.mxu0 %v569
    %613 = vmatpush.msra.mxu0 %v567
    %614 = vmatpush.msra.mxu0 %v565
    %615 = vmatpush.msra.mxu0 %v563
    %616 = vmatpush.msra.mxu0 %v561
    %617 = vmatpush.msra.mxu0 %v559
    %618 = vmatpush.msra.mxu0 %v557
    %619 = vmatpush.msra.mxu0 %v555
    %620 = vmatpush.msra.mxu0 %v553
    %621 = vmatpush.msra.mxu0 %v551
    %622 = vmatpush.msra.mxu0 %v549
    %623 = vmatmul.f32.gmra.mxu0 %v515
    %v624 = vpop.f32.mrf.mxu0
    %v625 = vadd.f32 %v605, %v624
    %626 = vdwg.mxu0
    %627 = vmatpush.msra.mxu0 %v548
    %628 = vmatpush.msra.mxu0 %v546
    %629 = vmatpush.msra.mxu0 %v544
    %630 = vmatpush.msra.mxu0 %v542
    %631 = vmatpush.msra.mxu0 %v540
    %632 = vmatpush.msra.mxu0 %v538
    %633 = vmatpush.msra.mxu0 %v536
    %634 = vmatpush.msra.mxu0 %v534
    %635 = vmatpush.msra.mxu0 %v532
    %636 = vmatpush.msra.mxu0 %v530
    %637 = vmatpush.msra.mxu0 %v528
    %638 = vmatpush.msra.mxu0 %v526
    %639 = vmatpush.msra.mxu0 %v524
    %640 = vmatpush.msra.mxu0 %v522
    %641 = vmatpush.msra.mxu0 %v520
    %642 = vmatpush.msra.mxu0 %v518
    %643 = vmatmul.f32.gmra.mxu0 %v495
    %v644 = vpop.f32.mrf.mxu0
    %v645 = vadd.f32 %v584, %v644
    %646 = vdwg.mxu0
    %647 = vmatpush.msra.mxu0 %v580
    %648 = vmatpush.msra.mxu0 %v578
    %649 = vmatpush.msra.mxu0 %v576
    %650 = vmatpush.msra.mxu0 %v574
    %651 = vmatpush.msra.mxu0 %v572
    %652 = vmatpush.msra.mxu0 %v570
    %653 = vmatpush.msra.mxu0 %v568
    %654 = vmatpush.msra.mxu0 %v566
    %655 = vmatpush.msra.mxu0 %v564
    %656 = vmatpush.msra.mxu0 %v562
    %657 = vmatpush.msra.mxu0 %v560
    %658 = vmatpush.msra.mxu0 %v558
    %659 = vmatpush.msra.mxu0 %v556
    %660 = vmatpush.msra.mxu0 %v554
    %661 = vmatpush.msra.mxu0 %v552
    %662 = vmatpush.msra.mxu0 %v550
    %663 = vmatmul.f32.gmra.mxu0 %v515
    %v664 = vpop.f32.mrf.mxu0
    %v665 = vadd.f32 %v645, %v664
    %666 = vdwg.mxu0
    %vm667 = vcmp.gt.f32.partialorder %v625, 0.0
    %vm668 = vcmp.gt.f32.partialorder %v665, 0.0
    %v669 = vmul.f32 %v625, 0.01
    %v670 = vmul.f32 %v665, 0.01
    %v671 = vsel %vm667, %v625, %v669
    %v672 = vsel %vm668, %v665, %v670
    %v673 = vld [vmem:[%s10] sm:$0xff]
    %v674 = vld [vmem:[%s10 + $0x8] sm:$0xff]
    %v675 = vld [vmem:[%s10 + $0x10] sm:$0xff]
    %v676 = vld [vmem:[%s10 + $0x18] sm:$0xff]
    %v677 = vld [vmem:[%s10 + $0x20] sm:$0xff]
    %v678 = vld [vmem:[%s10 + $0x28] sm:$0xff]
    %v679 = vld [vmem:[%s10 + $0x30] sm:$0xff]
    %v680 = vld [vmem:[%s10 + $0x38] sm:$0xff]
    %v681 = vld [vmem:[%s10 + $0x40] sm:$0xff]
    %v682 = vld [vmem:[%s10 + $0x48] sm:$0xff]
    %v683 = vld [vmem:[%s10 + $0x50] sm:$0xff]
    %v684 = vld [vmem:[%s10 + $0x58] sm:$0xff]
    %v685 = vld [vmem:[%s10 + $0x60] sm:$0xff]
    %v686 = vld [vmem:[%s10 + $0x68] sm:$0xff]
    %v687 = vld [vmem:[%s10 + $0x70] sm:$0xff]
    %v688 = vld [vmem:[%s10 + $0x78] sm:$0xff]
    %v689 = vld [vmem:[%s10 + $0x80] sm:$0xff]
    %v690 = vld [vmem:[%s10 + $0x88] sm:$0xff]
    %v691 = vld [vmem:[%s10 + $0x90] sm:$0xff]
    %v692 = vld [vmem:[%s10 + $0x98] sm:$0xff]
    %v693 = vld [vmem:[%s10 + $0xa0] sm:$0xff]
    %v694 = vld [vmem:[%s10 + $0xa8] sm:$0xff]
    %v695 = vld [vmem:[%s10 + $0xb0] sm:$0xff]
    %v696 = vld [vmem:[%s10 + $0xb8] sm:$0xff]
    %v697 = vld [vmem:[%s10 + $0xc0] sm:$0xff]
    %v698 = vld [vmem:[%s10 + $0xc8] sm:$0xff]
    %v699 = vld [vmem:[%s10 + $0xd0] sm:$0xff]
    %v700 = vld [vmem:[%s10 + $0xd8] sm:$0xff]
    %v701 = vld [vmem:[%s10 + $0xe0] sm:$0xff]
    %v702 = vld [vmem:[%s10 + $0xe8] sm:$0xff]
    %v703 = vld [vmem:[%s10 + $0xf0] sm:$0xff]
    %v704 = vld [vmem:[%s10 + $0xf8] sm:$0xff]
    %v705 = vld [vmem:[%s11] sm:$0x1]
    %v707 = vperm.slane %v705, 0
    %709 = vmatpush.msra.mxu0 %v688
    %710 = vmatpush.msra.mxu0 %v687
    %711 = vmatpush.msra.mxu0 %v686
    %712 = vmatpush.msra.mxu0 %v685
    %713 = vmatpush.msra.mxu0 %v684
    %714 = vmatpush.msra.mxu0 %v683
    %715 = vmatpush.msra.mxu0 %v682
    %716 = vmatpush.msra.mxu0 %v681
    %717 = vmatpush.msra.mxu0 %v680
    %718 = vmatpush.msra.mxu0 %v679
    %719 = vmatpush.msra.mxu0 %v678
    %720 = vmatpush.msra.mxu0 %v677
    %721 = vmatpush.msra.mxu0 %v676
    %722 = vmatpush.msra.mxu0 %v675
    %723 = vmatpush.msra.mxu0 %v674
    %724 = vmatpush.msra.mxu0 %v673
    %725 = vmatmul.f32.gmra.mxu0 %v671
    %v726 = vpop.f32.mrf.mxu0
    %v727 = vadd.f32 %v707, %v726
    %728 = vdwg.mxu0
    %729 = vmatpush.msra.mxu0 %v704
    %730 = vmatpush.msra.mxu0 %v703
    %731 = vmatpush.msra.mxu0 %v702
    %732 = vmatpush.msra.mxu0 %v701
    %733 = vmatpush.msra.mxu0 %v700
    %734 = vmatpush.msra.mxu0 %v699
    %735 = vmatpush.msra.mxu0 %v698
    %736 = vmatpush.msra.mxu0 %v697
    %737 = vmatpush.msra.mxu0 %v696
    %738 = vmatpush.msra.mxu0 %v695
    %739 = vmatpush.msra.mxu0 %v694
    %740 = vmatpush.msra.mxu0 %v693
    %741 = vmatpush.msra.mxu0 %v692
    %742 = vmatpush.msra.mxu0 %v691
    %743 = vmatpush.msra.mxu0 %v690
    %744 = vmatpush.msra.mxu0 %v689
    %745 = vmatmul.f32.gmra.mxu0 %v672
    %v746 = vpop.f32.mrf.mxu0
    %v747 = vadd.f32 %v727, %v746
    %748 = vdwg.mxu0
    %vm749 = vcmask 9216
    %750 = vst.msk [vmem:[#allocation8] sm:$0x3] %vm749, %v747
    // Predicated region
    $region58: #{_fused_forward.1} parent=1 // pred_check
      _
    $region59: #{_fused_forward.1} parent=1 // pred_check_branch
      %752 = sbr.rel (0) target = $region61
    $region60: #{_fused_forward.1} parent=1 // pred_region
      %754 = vsyncadd [#allocation5], 0
      %s756 = sshll.u32 [#allocation8], 4
      %s757 = int_to_ptr.vmem [resolvable:$true] %s756
      %s758 = sshll.u32 %s12, 4
      %s759 = int_to_ptr.hbm [resolvable:$true] %s758
      %761 = dma.vmem_to_hbm [thread:$0]  %s757, 32, %s759, [#allocation5]
    $region61: #{_fused_forward.1} parent=1 // pred_fallthru
      _
    // Predicated region
    $region62: #{_fused_forward.1} parent=1 // pred_check
      _
    $region63: #{_fused_forward.1} parent=1 // pred_check_branch
      %763 = sbr.rel (0) target = $region65
    $region64: #{_fused_forward.1} parent=1 // pred_region
      %765 = vsyncadd [#allocation10], 0
      %s767 = sshll.u32 [#allocation9], 4
      %s768 = int_to_ptr.vmem [resolvable:$true] %s767
      %s769 = sshll.u32 %s13, 4
      %s770 = int_to_ptr.hbm [resolvable:$true] %s769
      %772 = dma.vmem_to_hbm [thread:$0]  %s768, 32, %s770, [#allocation10]
    $region65: #{_fused_forward.1} parent=1 // pred_fallthru
      _
    // Predicated region
    $region66: #{_fused_forward.1} parent=1 // pred_check
      _
    $region67: #{_fused_forward.1} parent=1 // pred_check_branch
      %774 = sbr.rel (0) target = $region69
    $region68: #{_fused_forward.1} parent=1 // pred_region
      %776 = dma.done [#allocation5], 32
    $region69: #{_fused_forward.1} parent=1 // pred_fallthru
      _
    // Predicated region
    $region70: #{_fused_forward.1} parent=1 // pred_check
      _
    $region71: #{_fused_forward.1} parent=1 // pred_check_branch
      %778 = sbr.rel (0) target = $region73
    $region72: #{_fused_forward.1} parent=1 // pred_region
      %780 = dma.done [#allocation10], 32
    $region73: #{_fused_forward.1} parent=1 // pred_fallthru
      _
    %781 = vsyncpa [#allocation4], 1
    %782 = vsyncpa [#allocation7], 1
    %783 = vsyncpa [#allocation5], 1
    %784 = vsyncpa [#allocation10], 1

</llo_original>
